<compile_context>
chip_gen: v7x
topology: tpu7x:2x2x1
jax: 0.10.0
libtpu: 0.0.40
codegen_flags: <defaults>
</compile_context>

<pallas_src>
import functools

import jax
import jax.numpy as jnp
from jax.experimental import pallas as pl
from jax.experimental.pallas import tpu as pltpu


def _weighted_loss_kernel(out_ref, tgt_ref, loss_ref, *, epsilon, max_weight,
                          reduction, denom):
    i = pl.program_id(0)

    # Zero the resident accumulator on the first grid step.
    @pl.when(i == 0)
    def _():
        loss_ref[...] = jnp.zeros_like(loss_ref)

    o = out_ref[...]
    t = tgt_ref[...]
    if o.dtype != jnp.float32:
        o = o.astype(jnp.float32)
    if t.dtype != jnp.float32:
        t = t.astype(jnp.float32)

    # --- weight computation (torch.no_grad block) ---
    abs_t = jnp.maximum(jnp.abs(t), epsilon)            # _targets[_targets<eps]=eps
    row_sum = jnp.sum(abs_t, axis=1, keepdims=True)     # sum over dim=1, keepdim
    # divide -> EUP reciprocal (own VLIW slot, overlaps VPU/XLU work for free)
    weight = row_sum * pl.reciprocal(abs_t, approx=True)
    if max_weight is not None:
        weight = jnp.minimum(weight, max_weight)         # torch.clamp(max=...)

    # --- criterion: MSELoss(reduction='none') ---
    diff = o - t
    wl = weight * (diff * diff)

    # --- per-tile partial sum, accumulated into the resident (1,1) output ---
    tile_sum = jnp.sum(wl, axis=1, keepdims=True)        # (TILE_B, 1)
    tile_sum = jnp.sum(tile_sum, axis=0, keepdims=True)  # (1, 1)
    loss_ref[...] += tile_sum

    if reduction == "mean":
        @pl.when(i == pl.num_programs(0) - 1)
        def _():
            # Normalize by the FULL (unpadded) element count, once, at the end.
            loss_ref[...] = loss_ref[...] * (1.0 / denom)


def weighted_loss(outputs, targets, *, reduction="mean", max_weight=None,
                  epsilon=1e-8, block_rows=None):
    assert outputs.shape == targets.shape and outputs.ndim == 2
    if reduction not in ("mean", "sum"):
        raise NotImplementedError(f"reduction {reduction} not implemented")

    B, C = outputs.shape
    denom = float(B * C)   # mean normalizer uses the original (unpadded) size

    # --- tile selection: ~1 MiB per input tile, multiple of 8 rows, <= B ---
    if block_rows is None:
        bytes_per_row = C * 4
        target_rows = max(8, (1 << 20) // max(bytes_per_row, 1))
        block_rows = min(B, target_rows)
        if block_rows >= 8:
            block_rows = (block_rows // 8) * 8
        # if B < 8 we keep block_rows == B (full-extent block is always legal)
    block_rows = max(1, min(block_rows, B))

    # --- pad batch to a multiple of block_rows (zero rows contribute 0 loss) ---
    if B % block_rows != 0:
        pad = block_rows - (B % block_rows)
        outputs = jnp.pad(outputs, ((0, pad), (0, 0)))
        targets = jnp.pad(targets, ((0, pad), (0, 0)))
    Bp = outputs.shape[0]
    num_blocks = Bp // block_rows

    kernel = functools.partial(_weighted_loss_kernel, epsilon=epsilon,
                               max_weight=max_weight, reduction=reduction,
                               denom=denom)

    grid_spec = pltpu.PrefetchScalarGridSpec(
        num_scalar_prefetch=0,
        grid=(num_blocks,),
        in_specs=[
            pl.BlockSpec((block_rows, C), lambda i: (i, 0)),
            pl.BlockSpec((block_rows, C), lambda i: (i, 0)),
        ],
        # Resident scalar accumulator: same output block for every grid step.
        out_specs=pl.BlockSpec((1, 1), lambda i: (0, 0)),
    )

    out = pl.pallas_call(
        kernel,
        out_shape=jax.ShapeDtypeStruct((1, 1), jnp.float32),
        grid_spec=grid_spec,
        compiler_params=pltpu.CompilerParams(
            dimension_semantics=("arbitrary",),   # reduction axis -> serial
        ),
        cost_estimate=pl.CostEstimate(
            flops=6 * Bp * C,
            transcendentals=Bp * C,
            bytes_accessed=2 * Bp * C * 4,
        ),
    )(outputs, targets)
    return out[0, 0]   # scalar, matching PyTorch's 0-dim loss tensor


def _reference(outputs, targets, *, reduction="mean", max_weight=None,
               epsilon=1e-8):
    abs_t = jnp.maximum(jnp.abs(targets), epsilon)
    w = jnp.sum(abs_t, axis=1, keepdims=True) / abs_t
    if max_weight is not None:
        w = jnp.minimum(w, max_weight)
    loss = (outputs - targets) ** 2
    wl = w * loss
    return jnp.mean(wl) if reduction == "mean" else jnp.sum(wl)


if __name__ == "__main__":
    key = jax.random.PRNGKey(0)

    # Main small-shape check (B, C) = (8, 128): single tile.
    k_o, k_t, k2_o, k2_t = jax.random.split(key, 4)
    B, C = 8, 128
    outputs = jax.random.normal(k_o, (B, C), dtype=jnp.float32)
    targets = jax.random.normal(k_t, (B, C), dtype=jnp.float32)

    loss = weighted_loss(outputs, targets, reduction="mean", max_weight=10.0)
    jax.block_until_ready(loss)
    ref = _reference(outputs, targets, reduction="mean", max_weight=10.0)
    # approx reciprocal (EUP vrcp) is ~1e-4-level relative vs exact divide
    assert jnp.allclose(loss, ref, rtol=1e-3, atol=1e-3), (loss, ref)

    # Multi-tile + padding + accumulator check: B=20 with 16-row tiles -> grid=2.
    B2, C2 = 20, 128
    outputs2 = jax.random.normal(k2_o, (B2, C2), dtype=jnp.float32)
    targets2 = jax.random.normal(k2_t, (B2, C2), dtype=jnp.float32)

    loss2 = weighted_loss(outputs2, targets2, reduction="mean",
                          max_weight=10.0, block_rows=16)
    jax.block_until_ready(loss2)
    ref2 = _reference(outputs2, targets2, reduction="mean", max_weight=10.0)
    assert jnp.allclose(loss2, ref2, rtol=1e-3, atol=1e-3), (loss2, ref2)

    # reduction='sum' path (no max_weight clamp).
    loss3 = weighted_loss(outputs2, targets2, reduction="sum", block_rows=16)
    jax.block_until_ready(loss3)
    ref3 = _reference(outputs2, targets2, reduction="sum")
    assert jnp.allclose(loss3, ref3, rtol=1e-3, atol=1e-2), (loss3, ref3)

    print("KERNEL_OK")
</pallas_src>

<mosaic_0001>
module attributes {stable_mosaic.version = 11 : i64} {
  func.func @_weighted_loss_kernel(%arg0: i32, %arg1: memref<8x128xf32, #tpu.memory_space<vmem>>, %arg2: memref<8x128xf32, #tpu.memory_space<vmem>>, %arg3: memref<1x1xf32, #tpu.memory_space<vmem>>) attributes {dimension_semantics = [#tpu.dimension_semantics<arbitrary>], iteration_bounds = array<i64: 1>, scalar_prefetch = 0 : i64, scratch_operands = 0 : i64, tpu.core_type = #tpu.core_type<tc>, window_params = [{transform_indices = @transform_0, window_bounds = array<i64: 8, 128>}, {transform_indices = @transform_1, window_bounds = array<i64: 8, 128>}, {pipeline_mode = #tpu.pipeline_mode<synchronous>, transform_indices = @transform_2, window_bounds = array<i64: 1, 1>}]} {
    %c0_i32 = arith.constant 0 : i32
    %0 = arith.cmpi eq, %arg0, %c0_i32 : i32
    %1 = arith.extui %0 : i1 to i32
    %c0_i32_0 = arith.constant 0 : i32
    %2 = arith.cmpi ne, %1, %c0_i32_0 : i32
    scf.if %2 {
      %cst_14 = arith.constant 0.000000e+00 : f32
      %28 = vector.broadcast %cst_14 : f32 to vector<1x1xf32>
      %c0_15 = arith.constant 0 : index
      %c0_16 = arith.constant 0 : index
      %29 = vector.load %arg3[%c0_15, %c0_16] : memref<1x1xf32, #tpu.memory_space<vmem>>, vector<1x1xf32>
      tpu.vector_store %arg3[%c0_15, %c0_16], %28 {strides = array<i32>} : memref<1x1xf32, #tpu.memory_space<vmem>>, vector<1x1xf32>,
    } else {
    }
    %c0 = arith.constant 0 : index
    %c0_1 = arith.constant 0 : index
    %3 = vector.load %arg1[%c0, %c0_1] : memref<8x128xf32, #tpu.memory_space<vmem>>, vector<8x128xf32>
    %c0_2 = arith.constant 0 : index
    %c0_3 = arith.constant 0 : index
    %4 = vector.load %arg2[%c0_2, %c0_3] : memref<8x128xf32, #tpu.memory_space<vmem>>, vector<8x128xf32>
    %5 = math.absf %4 : vector<8x128xf32>
    %cst = arith.constant 9.99999993E-9 : f32
    %6 = vector.broadcast %cst : f32 to vector<8x128xf32>
    %7 = arith.maximumf %5, %6 : vector<8x128xf32>
    %cst_4 = arith.constant dense<0.000000e+00> : vector<8xf32>
    %8 = vector.multi_reduction <add>, %7, %cst_4 [1] : vector<8x128xf32> to vector<8xf32>
    %9 = vector.shape_cast %8 : vector<8xf32> to vector<8x1xf32>
    %10 = tpu.reciprocal %7 {approx = true} : vector<8x128xf32> -> vector<8x128xf32>
    %11 = vector.broadcast %9 : vector<8x1xf32> to vector<8x128xf32>
    %12 = arith.mulf %11, %10 : vector<8x128xf32>
    %cst_5 = arith.constant 1.000000e+01 : f32
    %13 = vector.broadcast %cst_5 : f32 to vector<8x128xf32>
    %14 = arith.minimumf %12, %13 : vector<8x128xf32>
    %15 = arith.subf %3, %4 : vector<8x128xf32>
    %16 = arith.mulf %15, %15 : vector<8x128xf32>
    %17 = arith.mulf %14, %16 : vector<8x128xf32>
    %cst_6 = arith.constant dense<0.000000e+00> : vector<8xf32>
    %18 = vector.multi_reduction <add>, %17, %cst_6 [1] : vector<8x128xf32> to vector<8xf32>
    %19 = vector.shape_cast %18 : vector<8xf32> to vector<8x1xf32>
    %cst_7 = arith.constant dense<0.000000e+00> : vector<1xf32>
    %20 = vector.multi_reduction <add>, %19, %cst_7 [0] : vector<8x1xf32> to vector<1xf32>
    %21 = vector.shape_cast %20 : vector<1xf32> to vector<1x1xf32>
    %c0_8 = arith.constant 0 : index
    %c0_9 = arith.constant 0 : index
    %22 = vector.load %arg3[%c0_8, %c0_9] : memref<1x1xf32, #tpu.memory_space<vmem>>, vector<1x1xf32>
    %23 = arith.addf %22, %21 : vector<1x1xf32>
    %c0_10 = arith.constant 0 : index
    %c0_11 = arith.constant 0 : index
    %24 = vector.load %arg3[%c0_10, %c0_11] : memref<1x1xf32, #tpu.memory_space<vmem>>, vector<1x1xf32>
    tpu.vector_store %arg3[%c0_10, %c0_11], %23 {strides = array<i32>} : memref<1x1xf32, #tpu.memory_space<vmem>>, vector<1x1xf32>,
    %c0_i32_12 = arith.constant 0 : i32
    %25 = arith.cmpi eq, %arg0, %c0_i32_12 : i32
    %26 = arith.extui %25 : i1 to i32
    %c0_i32_13 = arith.constant 0 : i32
    %27 = arith.cmpi ne, %26, %c0_i32_13 : i32
    scf.if %27 {
      %c0_14 = arith.constant 0 : index
      %c0_15 = arith.constant 0 : index
      %28 = vector.load %arg3[%c0_14, %c0_15] : memref<1x1xf32, #tpu.memory_space<vmem>>, vector<1x1xf32>
      %cst_16 = arith.constant 9.765625E-4 : f32
      %29 = vector.broadcast %cst_16 : f32 to vector<1x1xf32>
      %30 = arith.mulf %28, %29 : vector<1x1xf32>
      %c0_17 = arith.constant 0 : index
      %c0_18 = arith.constant 0 : index
      %31 = vector.load %arg3[%c0_17, %c0_18] : memref<1x1xf32, #tpu.memory_space<vmem>>, vector<1x1xf32>
      tpu.vector_store %arg3[%c0_17, %c0_18], %30 {strides = array<i32>} : memref<1x1xf32, #tpu.memory_space<vmem>>, vector<1x1xf32>,
    } else {
    }
    return
  }
  func.func @transform_0(%arg0: i32) -> (i32, i32) {
    %c0_i32 = arith.constant 0 : i32
    %c0_i32_0 = arith.constant 0 : i32
    return %arg0, %c0_i32 : i32, i32
  }
  func.func @transform_1(%arg0: i32) -> (i32, i32) {
    %c0_i32 = arith.constant 0 : i32
    %c0_i32_0 = arith.constant 0 : i32
    return %arg0, %c0_i32 : i32, i32
  }
  func.func @transform_2(%arg0: i32) -> (i32, i32) {
    %c0_i32 = arith.constant 0 : i32
    %c0_i32_0 = arith.constant 0 : i32
    %c0_i32_1 = arith.constant 0 : i32
    return %c0_i32, %c0_i32_0 : i32, i32
  }
}

</mosaic_0001>

<llo_original>
// kernel: tpu_custom_call.1
$region0: #{tpu_custom_call.1}
  #allocation0 [shape = 'u32[]', space=smem, size = 0x4, offset = 0x4, fixed_abs, tag = 'smem constant byte address 0x4 - core index']
  #allocation1 [shape = 'u32[144,128]{1,0:T(1,128)}', space=vmem, size = 0x12000, scoped, tag = 'internal scratch']
  %s0 = inlined_call_operand.hbm [shape: f32[8,128], index: 0, kind: input, shape index: {}]
  %s1 = inlined_call_operand.hbm [shape: f32[8,128], index: 1, kind: input, shape index: {}]
  %s2 = inlined_call_operand.hbm [shape: f32[1,1], index: 2, kind: output, shape index: {}]
  %s3 = sld [smem:[#allocation0]]
  $region34: #{tpu_custom_call.1} parent=0
    _
  %s5 = ssub.s32 1, %s3
  %s6 = scalar_select 0, %s5, %s3
  $region1: #{tpu_custom_call.1} parent=0
    #allocation2 [shape = 'u8[4096]{0}', space=vmem, size = 0x1000, scoped, tag = 'input window, operand 0, single buffered']
    #allocation3 [shape = 's32[1]{0}', space=sflag, size = 0x4, scoped, tag = 'scoped memory for tpu_custom_call.1']
    #allocation4 [shape = 's32[1]{0}', space=sflag, size = 0x4, scoped, tag = 'scoped memory for tpu_custom_call.1']
    #allocation5 [shape = 'u8[4096]{0}', space=vmem, size = 0x1000, scoped, tag = 'input window, operand 1, single buffered']
    #allocation6 [shape = 's32[1]{0}', space=sflag, size = 0x4, scoped, tag = 'scoped memory for tpu_custom_call.1']
    #allocation7 [shape = 'u8[512]{0}', space=vmem, size = 0x400, scoped, tag = 'output window, operand 0, single buffered']
    %7 = vsyncpa [#allocation3], 0
    %8 = vsyncpa [#allocation6], 0
    %9 = vsyncpa [#allocation4], 0
    // Predicated region
    $region2: #{tpu_custom_call.1} parent=1 // pred_check
      _
    $region3: #{tpu_custom_call.1} parent=1 // pred_check_branch
      %11 = sbr.rel (0) target = $region5
    $region4: #{tpu_custom_call.1} parent=1 // pred_region
      %s13 = ssub.s32 128, 128
      %14 = vsyncadd [#allocation3], %s13
      %s16 = sshll.u32 [#allocation2], 4
      %s17 = int_to_ptr.vmem [resolvable:$true] %s16
      %19 = dma.hbm_to_vmem [thread:$0]  %s0, 128, %s17, [#allocation3]
    $region5: #{tpu_custom_call.1} parent=1 // pred_fallthru
      _
    // Predicated region
    $region6: #{tpu_custom_call.1} parent=1 // pred_check
      _
    $region7: #{tpu_custom_call.1} parent=1 // pred_check_branch
      %21 = sbr.rel (0) target = $region9
    $region8: #{tpu_custom_call.1} parent=1 // pred_region
      %s23 = ssub.s32 128, 128
      %24 = vsyncadd [#allocation6], %s23
      %s26 = sshll.u32 [#allocation5], 4
      %s27 = int_to_ptr.vmem [resolvable:$true] %s26
      %29 = dma.hbm_to_vmem [thread:$0]  %s1, 128, %s27, [#allocation6]
    $region9: #{tpu_custom_call.1} parent=1 // pred_fallthru
      _
    // Predicated region
    $region10: #{tpu_custom_call.1} parent=1 // pred_check
      _
    $region11: #{tpu_custom_call.1} parent=1 // pred_check_branch
      %31 = sbr.rel (0) target = $region13
    $region12: #{tpu_custom_call.1} parent=1 // pred_region
      %32 = dma.done [#allocation3], 128
    $region13: #{tpu_custom_call.1} parent=1 // pred_fallthru
      _
    // Predicated region
    $region14: #{tpu_custom_call.1} parent=1 // pred_check
      _
    $region15: #{tpu_custom_call.1} parent=1 // pred_check_branch
      %34 = sbr.rel (0) target = $region17
    $region16: #{tpu_custom_call.1} parent=1 // pred_region
      %35 = dma.done [#allocation6], 128
    $region17: #{tpu_custom_call.1} parent=1 // pred_fallthru
      _
    %p36 = scmp.eq.s32.totalorder 0, 0
    // Predicated region
    $region18: #{tpu_custom_call.1} parent=1 // pred_check
      %p37 = pneg %p36
    $region19: #{tpu_custom_call.1} parent=1 // pred_check_branch
      %39 = sbr.rel (%p37) target = $region21
    $region20: #{tpu_custom_call.1} parent=1 // pred_region
      %vm40 = vcmask 0
      %41 = vst.msk [vmem:[#allocation7] sm:$0x1] %vm40, 0.0
    $region21: #{tpu_custom_call.1} parent=1 // pred_fallthru
      _
    %v42 = vld [vmem:[#allocation2] sm:$0xff]
    %v43 = vld [vmem:[#allocation5] sm:$0xff]
    %v44 = vand.u32 2147483647, %v43
    %v45 = vmax.f32 %v44, 1e-08
    %46 = vadd.xlane.f32.xlu0 %v45
    %v47 = vpop.xlane.xlu0 %46
    %v48 = vrcp.pop %v45
    %v49 = vmul.f32 %v47, %v48
    %v50 = vmin.f32 %v49, 10.0
    %v51 = vsub.f32 %v42, %v43
    %v52 = vmul.f32 %v51, %v51
    %v53 = vmul.f32 %v50, %v52
    %54 = vadd.xlane.f32.xlu0 %v53
    %v55 = vpop.xlane.xlu0 %54
    %v56 = vrot.slane %v55, 4
    %v57 = vadd.f32 %v55, %v56
    %v58 = vrot.slane %v57, 2
    %v59 = vadd.f32 %v57, %v58
    %v60 = vrot.slane %v59, 1
    %v61 = vadd.f32 %v59, %v60
    %v62 = vld [vmem:[#allocation7] sm:$0x1]
    %v63 = vadd.f32 %v62, %v61
    %vm64 = vcmask 0
    %65 = vst.msk [vmem:[#allocation7] sm:$0x1] %vm64, %v63
    // Predicated region
    $region22: #{tpu_custom_call.1} parent=1 // pred_check
      %p66 = pneg %p36
    $region23: #{tpu_custom_call.1} parent=1 // pred_check_branch
      %68 = sbr.rel (%p66) target = $region25
    $region24: #{tpu_custom_call.1} parent=1 // pred_region
      %v69 = vld [vmem:[#allocation7] sm:$0x1]
      %v70 = vmul.f32 %v69, 0.0009765625
      %71 = vst.msk [vmem:[#allocation7] sm:$0x1] %vm64, %v70
    $region25: #{tpu_custom_call.1} parent=1 // pred_fallthru
      _
    // Predicated region
    $region26: #{tpu_custom_call.1} parent=1 // pred_check
      _
    $region27: #{tpu_custom_call.1} parent=1 // pred_check_branch
      %73 = sbr.rel (0) target = $region29
    $region28: #{tpu_custom_call.1} parent=1 // pred_region
      %s75 = ssub.s32 16, 16
      %76 = vsyncadd [#allocation4], %s75
      %s78 = sshll.u32 [#allocation7], 4
      %s79 = int_to_ptr.vmem [resolvable:$true] %s78
      %81 = dma.vmem_to_hbm [thread:$0]  %s79, 16, %s2, [#allocation4]
    $region29: #{tpu_custom_call.1} parent=1 // pred_fallthru
      _
    // Predicated region
    $region30: #{tpu_custom_call.1} parent=1 // pred_check
      _
    $region31: #{tpu_custom_call.1} parent=1 // pred_check_branch
      %83 = sbr.rel (0) target = $region33
    $region32: #{tpu_custom_call.1} parent=1 // pred_region
      %84 = dma.done [#allocation4], 16
    $region33: #{tpu_custom_call.1} parent=1 // pred_fallthru
      _
    %85 = vsyncpa [#allocation3], 1
    %86 = vsyncpa [#allocation6], 1
    %87 = vsyncpa [#allocation4], 1

</llo_original>
